<compile_context>
chip_gen: v6e
topology: v6e:2x2x1
jax: 0.10.0
libtpu: 0.0.40
codegen_flags: <defaults>
</compile_context>

<pallas_src>
import jax
import jax.numpy as jnp
import numpy as np
from jax.experimental import pallas as pl
from jax.experimental.pallas import tpu as pltpu

# ----------------------------- config (small) -------------------------------
FILTER_SIZES = [1, 2, 3, 5]          # as in the module
NUM_FILTERS = 36                     # as in the module
KMAX = max(FILTER_SIZES)             # 5
N_K = len(FILTER_SIZES)              # 4
NKF = N_K * NUM_FILTERS              # 144 fused conv channels (lane-dense)
EMBED = 64                           # small stand-in for embed_size=300
VOCAB = 100                          # small stand-in for max_features=120000
SEQ_LEN = 16                         # sequence length L
BATCH = 2
N_CLASSES = 6                        # small stand-in for len(le.classes_)
KE = KMAX * EMBED                    # 320 fused contraction dim


# ------------------------------- kernel -------------------------------------
def cnn_text_kernel(x_ref, w_ref, b_ref, mask_ref, fcw_ref, fcb_ref, out_ref):
    # x_ref:    (B*L, KMAX*E)   sliding windows, batch folded into M
    # w_ref:    (KMAX*E, NKF)   fused conv weights (taps >= K zero-padded)
    # b_ref:    (1, NKF)        fused conv biases
    # mask_ref: (B*L, NKF)      1.0 at valid conv positions per filter size
    # fcw_ref:  (NKF, C)        fc1 weight (transposed)
    # fcb_ref:  (1, C)          fc1 bias
    # out_ref:  (B, C)          logits
    #
    # One MXU matmul covers all filter sizes and all taps.
    acc = jnp.dot(x_ref[...], w_ref[...], preferred_element_type=jnp.float32)
    # ReLU + static validity mask (zeroing is safe only because ReLU >= 0).
    s = jnp.maximum(acc + b_ref[...], 0.0) * mask_ref[...]
    # Max-pool over time per batch row.  Static Python loop over the tiny
    # batch (sublane slices at multiples of 8) avoids an in-kernel reshape.
    pooled = jnp.concatenate(
        [jnp.max(s[b * SEQ_LEN:(b + 1) * SEQ_LEN, :], axis=0, keepdims=True)
         for b in range(BATCH)], axis=0)                       # (B, NKF)
    # dropout(p=0.1) -> identity at inference
    out_ref[...] = (jnp.dot(pooled, fcw_ref[...],
                            preferred_element_type=jnp.float32)
                    + fcb_ref[...])


def cnn_text_forward(x_emb, w_fused, b_fused, mask, fcw, fcb):
    """x_emb: (B, L, E) float32 embedded tokens -> (B, C) logits."""
    # Build the KMAX-tap sliding windows once in XLA (tiny, ~40 KB), so the
    # kernel is a single dense matmul over the fused contraction dim.
    x_pad = jnp.pad(x_emb, ((0, 0), (0, KMAX - 1), (0, 0)))            # (B, L+K-1, E)
    x_win = jnp.concatenate(
        [x_pad[:, j:j + SEQ_LEN, :] for j in range(KMAX)], axis=-1)    # (B, L, K*E)
    x_win = x_win.reshape(BATCH * SEQ_LEN, KE)                         # (B*L, K*E)

    vmem = pl.BlockSpec(memory_space=pltpu.MemorySpace.VMEM)
    return pl.pallas_call(
        cnn_text_kernel,
        out_shape=jax.ShapeDtypeStruct((BATCH, N_CLASSES), jnp.float32),
        in_specs=[vmem, vmem, vmem, vmem, vmem, vmem],
        out_specs=vmem,
    )(x_win, w_fused, b_fused, mask, fcw, fcb)


# --------------------------- pure-JAX reference ------------------------------
def reference_forward(x_emb, conv_ws, conv_bs, fcw, fcb):
    feats = []
    for K, w, b in zip(FILTER_SIZES, conv_ws, conv_bs):
        outs = []
        for t in range(SEQ_LEN - K + 1):
            window = x_emb[:, t:t + K, :]                        # (B, K, E)
            outs.append(jnp.einsum('bke,fke->bf', window, w) + b)
        s = jnp.maximum(jnp.stack(outs, axis=2), 0.0)            # (B, F, T)
        feats.append(jnp.max(s, axis=2))                         # (B, F)
    feat = jnp.concatenate(feats, axis=1)                        # (B, N_K*F)
    return feat @ fcw + fcb


# --------------------------------- main --------------------------------------
if __name__ == "__main__":
    key = jax.random.PRNGKey(0)
    k_emb, k_tok, k_fcw, k_fcb, *k_convs = jax.random.split(key, 4 + 2 * N_K)

    # deterministic synthetic parameters (shapes follow the module __init__)
    embedding_matrix = jax.random.normal(k_emb, (VOCAB, EMBED), jnp.float32) * 0.1
    tokens = jax.random.randint(k_tok, (BATCH, SEQ_LEN), 0, VOCAB)

    conv_ws, conv_bs = [], []
    for i, K in enumerate(FILTER_SIZES):
        kw, kb = jax.random.split(k_convs[i])
        # Conv2d(1, F, (K, E)) weight (F, 1, K, E) with channel dim squeezed.
        conv_ws.append(jax.random.normal(kw, (NUM_FILTERS, K, EMBED),
                                         jnp.float32) * 0.1)
        conv_bs.append(jax.random.normal(kb, (NUM_FILTERS,), jnp.float32) * 0.1)

    fcw = jax.random.normal(k_fcw, (NKF, N_CLASSES), jnp.float32) * 0.1
    fcb = jax.random.normal(k_fcb, (N_CLASSES,), jnp.float32) * 0.1

    # --- pack fused conv weight (KMAX*E, N_K*F), zero-padding unused taps ----
    w_fused_np = np.zeros((KE, NKF), np.float32)
    for k, (K, w) in enumerate(zip(FILTER_SIZES, conv_ws)):
        w_np = np.asarray(w)                                     # (F, K, E)
        for j in range(K):
            w_fused_np[j * EMBED:(j + 1) * EMBED,
                       k * NUM_FILTERS:(k + 1) * NUM_FILTERS] = w_np[:, j, :].T
    w_fused = jnp.asarray(w_fused_np)
    b_fused = jnp.concatenate(conv_bs, axis=0).reshape(1, NKF)   # (1, N_K*F)

    # --- static time-validity mask: valid conv positions t <= L - K ----------
    mask_np = np.zeros((SEQ_LEN, NKF), np.float32)
    for k, K in enumerate(FILTER_SIZES):
        mask_np[:SEQ_LEN - K + 1, k * NUM_FILTERS:(k + 1) * NUM_FILTERS] = 1.0
    mask = jnp.asarray(np.tile(mask_np, (BATCH, 1)))             # (B*L, N_K*F)

    # embedding lookup (glue, plain JAX gather)
    x_emb = embedding_matrix[tokens]                             # (B, L, E)

    logits = cnn_text_forward(x_emb, w_fused, b_fused, mask, fcw,
                              fcb.reshape(1, N_CLASSES))
    logits = jax.block_until_ready(logits)

    ref = reference_forward(x_emb, conv_ws, conv_bs, fcw, fcb)
    np.testing.assert_allclose(np.asarray(logits), np.asarray(ref),
                               rtol=1e-4, atol=1e-4)
    print("KERNEL_OK")
</pallas_src>

<mosaic_0001>
module attributes {stable_mosaic.version = 11 : i64} {
  func.func @cnn_text_kernel(%arg0: memref<32x320xf32, #tpu.memory_space<vmem>>, %arg1: memref<320x144xf32, #tpu.memory_space<vmem>>, %arg2: memref<1x144xf32, #tpu.memory_space<vmem>>, %arg3: memref<32x144xf32, #tpu.memory_space<vmem>>, %arg4: memref<144x6xf32, #tpu.memory_space<vmem>>, %arg5: memref<1x6xf32, #tpu.memory_space<vmem>>, %arg6: memref<2x6xf32, #tpu.memory_space<vmem>>) attributes {dimension_semantics = [], scalar_prefetch = 0 : i64, scratch_operands = 0 : i64, tpu.core_type = #tpu.core_type<tc>} {
    %c0 = arith.constant 0 : index
    %c0_0 = arith.constant 0 : index
    %0 = vector.load %arg0[%c0, %c0_0] : memref<32x320xf32, #tpu.memory_space<vmem>>, vector<32x320xf32>
    %c0_1 = arith.constant 0 : index
    %c0_2 = arith.constant 0 : index
    %1 = vector.load %arg1[%c0_1, %c0_2] : memref<320x144xf32, #tpu.memory_space<vmem>>, vector<320x144xf32>
    %cst = arith.constant dense<0.000000e+00> : vector<32x144xf32>
    %2 = tpu.matmul %0, %1, %cst {dimension_numbers = #tpu.dot_dimension_numbers<[1], [0], [0], [1], [0, 0, 1, 1], [], []>} : vector<32x320xf32>, vector<320x144xf32>, vector<32x144xf32> -> vector<32x144xf32>
    %c0_3 = arith.constant 0 : index
    %c0_4 = arith.constant 0 : index
    %3 = vector.load %arg2[%c0_3, %c0_4] : memref<1x144xf32, #tpu.memory_space<vmem>>, vector<1x144xf32>
    %4 = vector.broadcast %3 : vector<1x144xf32> to vector<32x144xf32>
    %5 = arith.addf %2, %4 : vector<32x144xf32>
    %cst_5 = arith.constant 0.000000e+00 : f32
    %6 = vector.broadcast %cst_5 : f32 to vector<32x144xf32>
    %7 = arith.maximumf %5, %6 : vector<32x144xf32>
    %c0_6 = arith.constant 0 : index
    %c0_7 = arith.constant 0 : index
    %8 = vector.load %arg3[%c0_6, %c0_7] : memref<32x144xf32, #tpu.memory_space<vmem>>, vector<32x144xf32>
    %9 = arith.mulf %7, %8 : vector<32x144xf32>
    %10 = vector.extract_strided_slice %9 {offsets = [0, 0], sizes = [16, 144], strides = [1, 1]} : vector<32x144xf32> to vector<16x144xf32>
    %cst_8 = arith.constant dense<0xFF800000> : vector<144xf32>
    %11 = vector.multi_reduction <maximumf>, %10, %cst_8 [0] : vector<16x144xf32> to vector<144xf32>
    %12 = vector.shape_cast %11 : vector<144xf32> to vector<1x144xf32>
    %13 = vector.extract_strided_slice %9 {offsets = [16, 0], sizes = [16, 144], strides = [1, 1]} : vector<32x144xf32> to vector<16x144xf32>
    %cst_9 = arith.constant dense<0xFF800000> : vector<144xf32>
    %14 = vector.multi_reduction <maximumf>, %13, %cst_9 [0] : vector<16x144xf32> to vector<144xf32>
    %15 = vector.shape_cast %14 : vector<144xf32> to vector<1x144xf32>
    %16 = tpu.concatenate %12, %15 in 0 : vector<1x144xf32>, vector<1x144xf32> -> vector<2x144xf32>
    %c0_10 = arith.constant 0 : index
    %c0_11 = arith.constant 0 : index
    %17 = vector.load %arg4[%c0_10, %c0_11] : memref<144x6xf32, #tpu.memory_space<vmem>>, vector<144x6xf32>
    %cst_12 = arith.constant dense<0.000000e+00> : vector<2x6xf32>
    %18 = tpu.matmul %16, %17, %cst_12 {dimension_numbers = #tpu.dot_dimension_numbers<[1], [0], [0], [1], [0, 0, 1, 1], [], []>} : vector<2x144xf32>, vector<144x6xf32>, vector<2x6xf32> -> vector<2x6xf32>
    %c0_13 = arith.constant 0 : index
    %c0_14 = arith.constant 0 : index
    %19 = vector.load %arg5[%c0_13, %c0_14] : memref<1x6xf32, #tpu.memory_space<vmem>>, vector<1x6xf32>
    %20 = vector.broadcast %19 : vector<1x6xf32> to vector<2x6xf32>
    %21 = arith.addf %18, %20 : vector<2x6xf32>
    %c0_15 = arith.constant 0 : index
    %c0_16 = arith.constant 0 : index
    %22 = vector.load %arg6[%c0_15, %c0_16] : memref<2x6xf32, #tpu.memory_space<vmem>>, vector<2x6xf32>
    tpu.vector_store %arg6[%c0_15, %c0_16], %21 {strides = array<i32>} : memref<2x6xf32, #tpu.memory_space<vmem>>, vector<2x6xf32>,
    return
  }
}

</mosaic_0001>

<llo_original>
// kernel: tpu_custom_call.1
$region0: #{tpu_custom_call.1}
  #allocation0 [shape = 'u32[]', space=smem, size = 0x4, offset = 0x4, fixed_abs, tag = 'smem constant byte address 0x4 - core index']
  #allocation1 [shape = 'u32[144,128]{1,0:T(1,128)}', space=vmem, size = 0x12000, scoped, tag = 'internal scratch']
  %s0 = inlined_call_operand.vmem [shape: f32[32,320], index: 0, kind: input, shape index: {}]
  %s1 = inlined_call_operand.vmem [shape: f32[320,144], index: 1, kind: input, shape index: {}]
  %s2 = inlined_call_operand.vmem [shape: f32[1,144], index: 2, kind: input, shape index: {}]
  %s3 = inlined_call_operand.vmem [shape: f32[32,144], index: 3, kind: input, shape index: {}]
  %s4 = inlined_call_operand.vmem [shape: f32[144,6], index: 4, kind: input, shape index: {}]
  %s5 = inlined_call_operand.vmem [shape: f32[1,6], index: 5, kind: input, shape index: {}]
  %s6 = inlined_call_operand.hbm [shape: f32[2,6], index: 6, kind: output, shape index: {}]
  %s7 = sld [smem:[#allocation0]]
  $region34: #{tpu_custom_call.1} parent=0
    _
  %s9 = ssub.s32 1, %s7
  %s10 = scalar_select 0, %s9, %s7
  $region1: #{tpu_custom_call.1} parent=0
    #allocation2 [shape = 'u8[1024]{0}', space=vmem, size = 0x400, scoped, tag = 'output window, operand 0, single buffered']
    #allocation3 [shape = 's32[1]{0}', space=sflag, size = 0x4, scoped, tag = 'scoped memory for tpu_custom_call.1']
    %11 = vsyncpa [#allocation3], 0
    // Predicated region
    $region2: #{tpu_custom_call.1} parent=1 // pred_check
      _
    $region3: #{tpu_custom_call.1} parent=1 // pred_check_branch
      %13 = sbr.rel (0) target = $region5
    $region4: #{tpu_custom_call.1} parent=1 // pred_region
      _
    $region5: #{tpu_custom_call.1} parent=1 // pred_fallthru
      _
    // Predicated region
    $region6: #{tpu_custom_call.1} parent=1 // pred_check
      _
    $region7: #{tpu_custom_call.1} parent=1 // pred_check_branch
      %15 = sbr.rel (0) target = $region9
    $region8: #{tpu_custom_call.1} parent=1 // pred_region
      _
    $region9: #{tpu_custom_call.1} parent=1 // pred_fallthru
      _
    // Predicated region
    $region10: #{tpu_custom_call.1} parent=1 // pred_check
      _
    $region11: #{tpu_custom_call.1} parent=1 // pred_check_branch
      %17 = sbr.rel (0) target = $region13
    $region12: #{tpu_custom_call.1} parent=1 // pred_region
      _
    $region13: #{tpu_custom_call.1} parent=1 // pred_fallthru
      _
    // Predicated region
    $region14: #{tpu_custom_call.1} parent=1 // pred_check
      _
    $region15: #{tpu_custom_call.1} parent=1 // pred_check_branch
      %19 = sbr.rel (0) target = $region17
    $region16: #{tpu_custom_call.1} parent=1 // pred_region
      _
    $region17: #{tpu_custom_call.1} parent=1 // pred_fallthru
      _
    // Predicated region
    $region18: #{tpu_custom_call.1} parent=1 // pred_check
      _
    $region19: #{tpu_custom_call.1} parent=1 // pred_check_branch
      %21 = sbr.rel (0) target = $region21
    $region20: #{tpu_custom_call.1} parent=1 // pred_region
      _
    $region21: #{tpu_custom_call.1} parent=1 // pred_fallthru
      _
    // Predicated region
    $region22: #{tpu_custom_call.1} parent=1 // pred_check
      _
    $region23: #{tpu_custom_call.1} parent=1 // pred_check_branch
      %23 = sbr.rel (0) target = $region25
    $region24: #{tpu_custom_call.1} parent=1 // pred_region
      _
    $region25: #{tpu_custom_call.1} parent=1 // pred_fallthru
      _
    %v24 = vld [vmem:[%s0] sm:$0xff]
    %v25 = vld [vmem:[%s0 + $0x8] sm:$0xff]
    %v26 = vld [vmem:[%s0 + $0x10] sm:$0xff]
    %v27 = vld [vmem:[%s0 + $0x18] sm:$0xff]
    %v28 = vld [vmem:[%s0 + $0x20] sm:$0xff]
    %v29 = vld [vmem:[%s0 + $0x28] sm:$0xff]
    %v30 = vld [vmem:[%s0 + $0x30] sm:$0xff]
    %v31 = vld [vmem:[%s0 + $0x38] sm:$0xff]
    %v32 = vld [vmem:[%s0 + $0x40] sm:$0xff]
    %v33 = vld [vmem:[%s0 + $0x48] sm:$0xff]
    %v34 = vld [vmem:[%s0 + $0x50] sm:$0xff]
    %v35 = vld [vmem:[%s0 + $0x58] sm:$0xff]
    %v36 = vld [vmem:[%s1] sm:$0xff]
    %v37 = vld [vmem:[%s1 + $0x8] sm:$0xff]
    %v38 = vld [vmem:[%s1 + $0x10] sm:$0xff]
    %v39 = vld [vmem:[%s1 + $0x18] sm:$0xff]
    %v40 = vld [vmem:[%s1 + $0x20] sm:$0xff]
    %v41 = vld [vmem:[%s1 + $0x28] sm:$0xff]
    %v42 = vld [vmem:[%s1 + $0x30] sm:$0xff]
    %v43 = vld [vmem:[%s1 + $0x38] sm:$0xff]
    %v44 = vld [vmem:[%s1 + $0x40] sm:$0xff]
    %v45 = vld [vmem:[%s1 + $0x48] sm:$0xff]
    %v46 = vld [vmem:[%s1 + $0x50] sm:$0xff]
    %v47 = vld [vmem:[%s1 + $0x58] sm:$0xff]
    %v48 = vld [vmem:[%s1 + $0x60] sm:$0xff]
    %v49 = vld [vmem:[%s1 + $0x68] sm:$0xff]
    %v50 = vld [vmem:[%s1 + $0x70] sm:$0xff]
    %v51 = vld [vmem:[%s1 + $0x78] sm:$0xff]
    %v52 = vld [vmem:[%s1 + $0x80] sm:$0xff]
    %v53 = vld [vmem:[%s1 + $0x88] sm:$0xff]
    %v54 = vld [vmem:[%s1 + $0x90] sm:$0xff]
    %v55 = vld [vmem:[%s1 + $0x98] sm:$0xff]
    %v56 = vld [vmem:[%s1 + $0xa0] sm:$0xff]
    %v57 = vld [vmem:[%s1 + $0xa8] sm:$0xff]
    %v58 = vld [vmem:[%s1 + $0xb0] sm:$0xff]
    %v59 = vld [vmem:[%s1 + $0xb8] sm:$0xff]
    %v60 = vld [vmem:[%s1 + $0xc0] sm:$0xff]
    %v61 = vld [vmem:[%s1 + $0xc8] sm:$0xff]
    %v62 = vld [vmem:[%s1 + $0xd0] sm:$0xff]
    %v63 = vld [vmem:[%s1 + $0xd8] sm:$0xff]
    %v64 = vld [vmem:[%s1 + $0xe0] sm:$0xff]
    %v65 = vld [vmem:[%s1 + $0xe8] sm:$0xff]
    %v66 = vld [vmem:[%s1 + $0xf0] sm:$0xff]
    %v67 = vld [vmem:[%s1 + $0xf8] sm:$0xff]
    %v68 = vld [vmem:[%s1 + $0x100] sm:$0xff]
    %v69 = vld [vmem:[%s1 + $0x108] sm:$0xff]
    %v70 = vld [vmem:[%s1 + $0x110] sm:$0xff]
    %v71 = vld [vmem:[%s1 + $0x118] sm:$0xff]
    %v72 = vld [vmem:[%s1 + $0x120] sm:$0xff]
    %v73 = vld [vmem:[%s1 + $0x128] sm:$0xff]
    %v74 = vld [vmem:[%s1 + $0x130] sm:$0xff]
    %v75 = vld [vmem:[%s1 + $0x138] sm:$0xff]
    %v76 = vld [vmem:[%s1 + $0x140] sm:$0xff]
    %v77 = vld [vmem:[%s1 + $0x148] sm:$0xff]
    %v78 = vld [vmem:[%s1 + $0x150] sm:$0xff]
    %v79 = vld [vmem:[%s1 + $0x158] sm:$0xff]
    %v80 = vld [vmem:[%s1 + $0x160] sm:$0xff]
    %v81 = vld [vmem:[%s1 + $0x168] sm:$0xff]
    %v82 = vld [vmem:[%s1 + $0x170] sm:$0xff]
    %v83 = vld [vmem:[%s1 + $0x178] sm:$0xff]
    %v84 = vld [vmem:[%s1 + $0x180] sm:$0xff]
    %v85 = vld [vmem:[%s1 + $0x188] sm:$0xff]
    %v86 = vld [vmem:[%s1 + $0x190] sm:$0xff]
    %v87 = vld [vmem:[%s1 + $0x198] sm:$0xff]
    %v88 = vld [vmem:[%s1 + $0x1a0] sm:$0xff]
    %v89 = vld [vmem:[%s1 + $0x1a8] sm:$0xff]
    %v90 = vld [vmem:[%s1 + $0x1b0] sm:$0xff]
    %v91 = vld [vmem:[%s1 + $0x1b8] sm:$0xff]
    %v92 = vld [vmem:[%s1 + $0x1c0] sm:$0xff]
    %v93 = vld [vmem:[%s1 + $0x1c8] sm:$0xff]
    %v94 = vld [vmem:[%s1 + $0x1d0] sm:$0xff]
    %v95 = vld [vmem:[%s1 + $0x1d8] sm:$0xff]
    %v96 = vld [vmem:[%s1 + $0x1e0] sm:$0xff]
    %v97 = vld [vmem:[%s1 + $0x1e8] sm:$0xff]
    %v98 = vld [vmem:[%s1 + $0x1f0] sm:$0xff]
    %v99 = vld [vmem:[%s1 + $0x1f8] sm:$0xff]
    %v100 = vld [vmem:[%s1 + $0x200] sm:$0xff]
    %v101 = vld [vmem:[%s1 + $0x208] sm:$0xff]
    %v102 = vld [vmem:[%s1 + $0x210] sm:$0xff]
    %v103 = vld [vmem:[%s1 + $0x218] sm:$0xff]
    %v104 = vld [vmem:[%s1 + $0x220] sm:$0xff]
    %v105 = vld [vmem:[%s1 + $0x228] sm:$0xff]
    %v106 = vld [vmem:[%s1 + $0x230] sm:$0xff]
    %v107 = vld [vmem:[%s1 + $0x238] sm:$0xff]
    %v108 = vld [vmem:[%s1 + $0x240] sm:$0xff]
    %v109 = vld [vmem:[%s1 + $0x248] sm:$0xff]
    %v110 = vld [vmem:[%s1 + $0x250] sm:$0xff]
    %v111 = vld [vmem:[%s1 + $0x258] sm:$0xff]
    %v112 = vld [vmem:[%s1 + $0x260] sm:$0xff]
    %v113 = vld [vmem:[%s1 + $0x268] sm:$0xff]
    %v114 = vld [vmem:[%s1 + $0x270] sm:$0xff]
    %v115 = vld [vmem:[%s1 + $0x278] sm:$0xff]
    %v116 = vld [vmem:[%s2] sm:$0x3]
    %v118 = vlaneseq
    %v119 = vshrl.u32 %v118, 7
    %v120 = vsub.s32 0, %v119
    %v121 = vrot.slane %v116, %v120
    %v122 = vlaneseq
    %v123 = vshrl.u32 %v122, 7
    %v124 = vsub.s32 1, %v123
    %v125 = vrot.slane %v116, %v124
    %vm128 = vcmask 523264
    %v130 = vsel %vm128, %v26, 0
    %v133 = vsel %vm128, %v29, 0
    %v136 = vsel %vm128, %v32, 0
    %v139 = vsel %vm128, %v35, 0
    %141 = vmatprep.subr.mxu0 %v67
    %142 = vmatpush1.msra.mxu0 %v66
    %143 = vmatprep.subr.mxu0 %v65
    %144 = vmatpush1.msra.mxu0 %v64
    %145 = vmatprep.subr.mxu0 %v63
    %146 = vmatpush1.msra.mxu0 %v62
    %147 = vmatprep.subr.mxu0 %v61
    %148 = vmatpush1.msra.mxu0 %v60
    %149 = vmatprep.subr.mxu0 %v59
    %150 = vmatpush1.msra.mxu0 %v58
    %151 = vmatprep.subr.mxu0 %v57
    %152 = vmatpush1.msra.mxu0 %v56
    %153 = vmatprep.subr.mxu0 %v55
    %154 = vmatpush1.msra.mxu0 %v54
    %155 = vmatprep.subr.mxu0 %v53
    %156 = vmatpush1.msra.mxu0 %v52
    %157 = vmatprep.subr.mxu0 %v51
    %158 = vmatpush1.msra.mxu0 %v50
    %159 = vmatprep.subr.mxu0 %v49
    %160 = vmatpush1.msra.mxu0 %v48
    %161 = vmatprep.subr.mxu0 %v47
    %162 = vmatpush1.msra.mxu0 %v46
    %163 = vmatprep.subr.mxu0 %v45
    %164 = vmatpush1.msra.mxu0 %v44
    %165 = vmatprep.subr.mxu0 %v43
    %166 = vmatpush1.msra.mxu0 %v42
    %167 = vmatprep.subr.mxu0 %v41
    %168 = vmatpush1.msra.mxu0 %v40
    %169 = vmatprep.subr.mxu0 %v39
    %170 = vmatpush1.msra.mxu0 %v38
    %171 = vmatprep.subr.mxu0 %v37
    %172 = vmatpush1.msra.mxu0 %v36
    %173 = vmatprep.subr.mxu0 %v99
    %174 = vmatpush2.msra.mxu0 %v98
    %175 = vmatprep.subr.mxu0 %v97
    %176 = vmatpush2.msra.mxu0 %v96
    %177 = vmatprep.subr.mxu0 %v95
    %178 = vmatpush2.msra.mxu0 %v94
    %179 = vmatprep.subr.mxu0 %v93
    %180 = vmatpush2.msra.mxu0 %v92
    %181 = vmatprep.subr.mxu0 %v91
    %182 = vmatpush2.msra.mxu0 %v90
    %183 = vmatprep.subr.mxu0 %v89
    %184 = vmatpush2.msra.mxu0 %v88
    %185 = vmatprep.subr.mxu0 %v87
    %186 = vmatpush2.msra.mxu0 %v86
    %187 = vmatprep.subr.mxu0 %v85
    %188 = vmatpush2.msra.mxu0 %v84
    %189 = vmatprep.subr.mxu0 %v83
    %190 = vmatpush2.msra.mxu0 %v82
    %191 = vmatprep.subr.mxu0 %v81
    %192 = vmatpush2.msra.mxu0 %v80
    %193 = vmatprep.subr.mxu0 %v79
    %194 = vmatpush2.msra.mxu0 %v78
    %195 = vmatprep.subr.mxu0 %v77
    %196 = vmatpush2.msra.mxu0 %v76
    %197 = vmatprep.subr.mxu0 %v75
    %198 = vmatpush2.msra.mxu0 %v74
    %199 = vmatprep.subr.mxu0 %v73
    %200 = vmatpush2.msra.mxu0 %v72
    %201 = vmatprep.subr.mxu0 %v71
    %202 = vmatpush2.msra.mxu0 %v70
    %203 = vmatprep.subr.mxu0 %v69
    %204 = vmatpush2.msra.mxu0 %v68
    %205 = vmatprep.mubr.f32.mxu0 %v25
    %206 = vmatmul.mubr.f32.gmra.mxu0 %v24
    %v207 = vpop.f32.mrf.mxu0
    %v208 = vadd.f32 %v121, %v207
    %v209 = vpop.f32.mrf.mxu0
    %v210 = vadd.f32 %v125, %v209
    %211 = vmatprep.mubr.f32.mxu0 %v28
    %212 = vmatmul.mubr.f32.gmra.mxu0 %v27
    %v213 = vpop.f32.mrf.mxu0
    %v214 = vadd.f32 %v121, %v213
    %v215 = vpop.f32.mrf.mxu0
    %v216 = vadd.f32 %v125, %v215
    %217 = vmatprep.mubr.f32.mxu0 %v31
    %218 = vmatmul.mubr.f32.gmra.mxu0 %v30
    %v219 = vpop.f32.mrf.mxu0
    %v220 = vadd.f32 %v121, %v219
    %v221 = vpop.f32.mrf.mxu0
    %v222 = vadd.f32 %v125, %v221
    %223 = vmatprep.mubr.f32.mxu0 %v34
    %224 = vmatmul.mubr.f32.gmra.mxu0 %v33
    %v225 = vpop.f32.mrf.mxu0
    %v226 = vadd.f32 %v121, %v225
    %v227 = vpop.f32.mrf.mxu0
    %v228 = vadd.f32 %v125, %v227
    %229 = vdwg.mxu0
    %230 = vmatprep.subr.mxu0 0.0
    %231 = vmatpush1.msra.mxu0 0.0
    %232 = vmatprep.subr.mxu0 0.0
    %233 = vmatpush1.msra.mxu0 0.0
    %234 = vmatprep.subr.mxu0 0.0
    %235 = vmatpush1.msra.mxu0 0.0
    %236 = vmatprep.subr.mxu0 0.0
    %237 = vmatpush1.msra.mxu0 0.0
    %238 = vmatprep.subr.mxu0 0.0
    %239 = vmatpush1.msra.mxu0 0.0
    %240 = vmatprep.subr.mxu0 0.0
    %241 = vmatpush1.msra.mxu0 0.0
    %242 = vmatprep.subr.mxu0 0.0
    %243 = vmatpush1.msra.mxu0 0.0
    %244 = vmatprep.subr.mxu0 0.0
    %245 = vmatpush1.msra.mxu0 0.0
    %246 = vmatprep.subr.mxu0 %v115
    %247 = vmatpush1.msra.mxu0 %v114
    %248 = vmatprep.subr.mxu0 %v113
    %249 = vmatpush1.msra.mxu0 %v112
    %250 = vmatprep.subr.mxu0 %v111
    %251 = vmatpush1.msra.mxu0 %v110
    %252 = vmatprep.subr.mxu0 %v109
    %253 = vmatpush1.msra.mxu0 %v108
    %254 = vmatprep.subr.mxu0 %v107
    %255 = vmatpush1.msra.mxu0 %v106
    %256 = vmatprep.subr.mxu0 %v105
    %257 = vmatpush1.msra.mxu0 %v104
    %258 = vmatprep.subr.mxu0 %v103
    %259 = vmatpush1.msra.mxu0 %v102
    %260 = vmatprep.subr.mxu0 %v101
    %261 = vmatpush1.msra.mxu0 %v100
    %262 = vmatprep.subr.mxu0 0.0
    %263 = vmatpush2.msra.mxu0 0.0
    %264 = vmatprep.subr.mxu0 0.0
    %265 = vmatpush2.msra.mxu0 0.0
    %266 = vmatprep.subr.mxu0 0.0
    %267 = vmatpush2.msra.mxu0 0.0
    %268 = vmatprep.subr.mxu0 0.0
    %269 = vmatpush2.msra.mxu0 0.0
    %270 = vmatprep.subr.mxu0 0.0
    %271 = vmatpush2.msra.mxu0 0.0
    %272 = vmatprep.subr.mxu0 0.0
    %273 = vmatpush2.msra.mxu0 0.0
    %274 = vmatprep.subr.mxu0 0.0
    %275 = vmatpush2.msra.mxu0 0.0
    %276 = vmatprep.subr.mxu0 0.0
    %277 = vmatpush2.msra.mxu0 0.0
    %278 = vmatprep.subr.mxu0 0.0
    %279 = vmatpush2.msra.mxu0 0.0
    %280 = vmatprep.subr.mxu0 0.0
    %281 = vmatpush2.msra.mxu0 0.0
    %282 = vmatprep.subr.mxu0 0.0
    %283 = vmatpush2.msra.mxu0 0.0
    %284 = vmatprep.subr.mxu0 0.0
    %285 = vmatpush2.msra.mxu0 0.0
    %286 = vmatprep.subr.mxu0 0.0
    %287 = vmatpush2.msra.mxu0 0.0
    %288 = vmatprep.subr.mxu0 0.0
    %289 = vmatpush2.msra.mxu0 0.0
    %290 = vmatprep.subr.mxu0 0.0
    %291 = vmatpush2.msra.mxu0 0.0
    %292 = vmatprep.subr.mxu0 0.0
    %293 = vmatpush2.msra.mxu0 0.0
    %294 = vmatprep.mubr.f32.mxu0 0.0
    %295 = vmatmul.mubr.f32.gmra.mxu0 %v130
    %v296 = vpop.f32.mrf.mxu0
    %v297 = vadd.f32 %v208, %v296
    %v298 = vpop.f32.mrf.mxu0
    %v299 = vadd.f32 %v210, %v298
    %300 = vmatprep.mubr.f32.mxu0 0.0
    %301 = vmatmul.mubr.f32.gmra.mxu0 %v133
    %v302 = vpop.f32.mrf.mxu0
    %v303 = vadd.f32 %v214, %v302
    %v304 = vpop.f32.mrf.mxu0
    %v305 = vadd.f32 %v216, %v304
    %306 = vmatprep.mubr.f32.mxu0 0.0
    %307 = vmatmul.mubr.f32.gmra.mxu0 %v136
    %v308 = vpop.f32.mrf.mxu0
    %v309 = vadd.f32 %v220, %v308
    %v310 = vpop.f32.mrf.mxu0
    %v311 = vadd.f32 %v222, %v310
    %312 = vmatprep.mubr.f32.mxu0 0.0
    %313 = vmatmul.mubr.f32.gmra.mxu0 %v139
    %v314 = vpop.f32.mrf.mxu0
    %v315 = vadd.f32 %v226, %v314
    %v316 = vpop.f32.mrf.mxu0
    %v317 = vadd.f32 %v228, %v316
    %318 = vdwg.mxu0
    %v319 = vmax.f32 %v297, 0.0
    %v320 = vmax.f32 %v299, 0.0
    %v321 = vmax.f32 %v303, 0.0
    %v322 = vmax.f32 %v305, 0.0
    %v323 = vmax.f32 %v309, 0.0
    %v324 = vmax.f32 %v311, 0.0
    %v325 = vmax.f32 %v315, 0.0
    %v326 = vmax.f32 %v317, 0.0
    %v327 = vld [vmem:[%s3] sm:$0xff]
    %v328 = vld [vmem:[%s3 + $0x8] sm:$0xff]
    %v329 = vld [vmem:[%s3 + $0x10] sm:$0xff]
    %v330 = vld [vmem:[%s3 + $0x18] sm:$0xff]
    %v331 = vld [vmem:[%s3 + $0x20] sm:$0xff]
    %v332 = vld [vmem:[%s3 + $0x28] sm:$0xff]
    %v333 = vld [vmem:[%s3 + $0x30] sm:$0xff]
    %v334 = vld [vmem:[%s3 + $0x38] sm:$0xff]
    %v335 = vmul.f32 %v319, %v327
    %v336 = vmul.f32 %v320, %v328
    %v337 = vmul.f32 %v321, %v329
    %v338 = vmul.f32 %v322, %v330
    %v339 = vmul.f32 %v323, %v331
    %v340 = vmul.f32 %v324, %v332
    %v341 = vmul.f32 %v325, %v333
    %v342 = vmul.f32 %v326, %v334
    %v343 = vmax.f32 %v335, %v337
    %v344 = vrot.slane %v343, 4
    %v345 = vmax.f32 %v343, %v344
    %v346 = vrot.slane %v345, 2
    %v347 = vmax.f32 %v345, %v346
    %v348 = vrot.slane %v347, 1
    %v349 = vmax.f32 %v347, %v348
    %vm350 = vcmask 130048
    %v351 = vsel %vm350, %v336, -inf
    %v352 = vsel %vm350, %v338, -inf
    %v353 = vmax.f32 %v351, %v352
    %v354 = vrot.slane %v353, 4
    %v355 = vmax.f32 %v353, %v354
    %v356 = vrot.slane %v355, 2
    %v357 = vmax.f32 %v355, %v356
    %v358 = vrot.slane %v357, 1
    %v359 = vmax.f32 %v357, %v358
    %v360 = vmax.f32 %v339, %v341
    %v361 = vrot.slane %v360, 4
    %v362 = vmax.f32 %v360, %v361
    %v363 = vrot.slane %v362, 2
    %v364 = vmax.f32 %v362, %v363
    %v365 = vrot.slane %v364, 1
    %v366 = vmax.f32 %v364, %v365
    %v367 = vsel %vm350, %v340, -inf
    %v368 = vsel %vm350, %v342, -inf
    %v369 = vmax.f32 %v367, %v368
    %v370 = vrot.slane %v369, 4
    %v371 = vmax.f32 %v369, %v370
    %v372 = vrot.slane %v371, 2
    %v373 = vmax.f32 %v371, %v372
    %v374 = vrot.slane %v373, 1
    %v375 = vmax.f32 %v373, %v374
    %vm376 = vcmask 1040384
    %v377 = vsel %vm376, %v349, %v366
    %v378 = vsel %vm376, %v359, %v375
    %v379 = vld [vmem:[%s4] sm:$0xff]
    %v380 = vld [vmem:[%s4 + $0x8] sm:$0xff]
    %v381 = vld [vmem:[%s4 + $0x10] sm:$0xff]
    %v382 = vld [vmem:[%s4 + $0x18] sm:$0xff]
    %v383 = vld [vmem:[%s4 + $0x20] sm:$0xff]
    %v384 = vld [vmem:[%s4 + $0x28] sm:$0xff]
    %v385 = vld [vmem:[%s4 + $0x30] sm:$0xff]
    %v386 = vld [vmem:[%s4 + $0x38] sm:$0xff]
    %v387 = vld [vmem:[%s4 + $0x40] sm:$0xff]
    %v388 = vld [vmem:[%s4 + $0x48] sm:$0xff]
    %v389 = vld [vmem:[%s4 + $0x50] sm:$0xff]
    %v390 = vld [vmem:[%s4 + $0x58] sm:$0xff]
    %v391 = vld [vmem:[%s4 + $0x60] sm:$0xff]
    %v392 = vld [vmem:[%s4 + $0x68] sm:$0xff]
    %v393 = vld [vmem:[%s4 + $0x70] sm:$0xff]
    %v394 = vld [vmem:[%s4 + $0x78] sm:$0xff]
    %v395 = vld [vmem:[%s4 + $0x80] sm:$0xff]
    %v396 = vld [vmem:[%s4 + $0x88] sm:$0xff]
    %v397 = vld [vmem:[%s5] sm:$0x1]
    %v399 = vlaneseq
    %v400 = vshrl.u32 %v399, 7
    %v401 = vsub.s32 0, %v400
    %v402 = vrot.slane %v397, %v401
    %v405 = vsel %vm350, %v378, 0
    %407 = vmatprep.subr.mxu0 0.0
    %408 = vmatpush1.msra.mxu0 %v394
    %409 = vmatprep.subr.mxu0 0.0
    %410 = vmatpush1.msra.mxu0 %v393
    %411 = vmatprep.subr.mxu0 0.0
    %412 = vmatpush1.msra.mxu0 %v392
    %413 = vmatprep.subr.mxu0 0.0
    %414 = vmatpush1.msra.mxu0 %v391
    %415 = vmatprep.subr.mxu0 0.0
    %416 = vmatpush1.msra.mxu0 %v390
    %417 = vmatprep.subr.mxu0 0.0
    %418 = vmatpush1.msra.mxu0 %v389
    %419 = vmatprep.subr.mxu0 0.0
    %420 = vmatpush1.msra.mxu0 %v388
    %421 = vmatprep.subr.mxu0 0.0
    %422 = vmatpush1.msra.mxu0 %v387
    %423 = vmatprep.subr.mxu0 0.0
    %424 = vmatpush1.msra.mxu0 %v386
    %425 = vmatprep.subr.mxu0 0.0
    %426 = vmatpush1.msra.mxu0 %v385
    %427 = vmatprep.subr.mxu0 0.0
    %428 = vmatpush1.msra.mxu0 %v384
    %429 = vmatprep.subr.mxu0 0.0
    %430 = vmatpush1.msra.mxu0 %v383
    %431 = vmatprep.subr.mxu0 0.0
    %432 = vmatpush1.msra.mxu0 %v382
    %433 = vmatprep.subr.mxu0 0.0
    %434 = vmatpush1.msra.mxu0 %v381
    %435 = vmatprep.subr.mxu0 0.0
    %436 = vmatpush1.msra.mxu0 %v380
    %437 = vmatprep.subr.mxu0 0.0
    %438 = vmatpush1.msra.mxu0 %v379
    %439 = vmatprep.subr.mxu0 0.0
    %440 = vmatpush2.msra.mxu0 0.0
    %441 = vmatprep.subr.mxu0 0.0
    %442 = vmatpush2.msra.mxu0 0.0
    %443 = vmatprep.subr.mxu0 0.0
    %444 = vmatpush2.msra.mxu0 0.0
    %445 = vmatprep.subr.mxu0 0.0
    %446 = vmatpush2.msra.mxu0 0.0
    %447 = vmatprep.subr.mxu0 0.0
    %448 = vmatpush2.msra.mxu0 0.0
    %449 = vmatprep.subr.mxu0 0.0
    %450 = vmatpush2.msra.mxu0 0.0
    %451 = vmatprep.subr.mxu0 0.0
    %452 = vmatpush2.msra.mxu0 0.0
    %453 = vmatprep.subr.mxu0 0.0
    %454 = vmatpush2.msra.mxu0 0.0
    %455 = vmatprep.subr.mxu0 0.0
    %456 = vmatpush2.msra.mxu0 0.0
    %457 = vmatprep.subr.mxu0 0.0
    %458 = vmatpush2.msra.mxu0 0.0
    %459 = vmatprep.subr.mxu0 0.0
    %460 = vmatpush2.msra.mxu0 0.0
    %461 = vmatprep.subr.mxu0 0.0
    %462 = vmatpush2.msra.mxu0 0.0
    %463 = vmatprep.subr.mxu0 0.0
    %464 = vmatpush2.msra.mxu0 0.0
    %465 = vmatprep.subr.mxu0 0.0
    %466 = vmatpush2.msra.mxu0 0.0
    %467 = vmatprep.subr.mxu0 0.0
    %468 = vmatpush2.msra.mxu0 %v396
    %469 = vmatprep.subr.mxu0 0.0
    %470 = vmatpush2.msra.mxu0 %v395
    %471 = vmatprep.mubr.f32.mxu0 %v405
    %472 = vmatmul.mubr.f32.gmra.mxu0 %v377
    %v473 = vpop.f32.mrf.mxu0
    %v474 = vadd.f32 %v402, %v473
    %v475 = vpop.f32.mrf.mxu0
    %476 = vdwg.mxu0
    %vm477 = vcmask 41984
    %478 = vst.msk [vmem:[#allocation2] sm:$0x3] %vm477, %v474
    // Predicated region
    $region26: #{tpu_custom_call.1} parent=1 // pred_check
      _
    $region27: #{tpu_custom_call.1} parent=1 // pred_check_branch
      %480 = sbr.rel (0) target = $region29
    $region28: #{tpu_custom_call.1} parent=1 // pred_region
      %s482 = ssub.s32 32, 32
      %483 = vsyncadd [#allocation3], %s482
      %s485 = sshll.u32 [#allocation2], 4
      %s486 = int_to_ptr.vmem [resolvable:$true] %s485
      %488 = dma.vmem_to_hbm [thread:$0]  %s486, 32, %s6, [#allocation3]
    $region29: #{tpu_custom_call.1} parent=1 // pred_fallthru
      _
    // Predicated region
    $region30: #{tpu_custom_call.1} parent=1 // pred_check
      _
    $region31: #{tpu_custom_call.1} parent=1 // pred_check_branch
      %490 = sbr.rel (0) target = $region33
    $region32: #{tpu_custom_call.1} parent=1 // pred_region
      %491 = dma.done [#allocation3], 32
    $region33: #{tpu_custom_call.1} parent=1 // pred_fallthru
      _
    %492 = vsyncpa [#allocation3], 1

</llo_original>
